<compile_context>
chip_gen: v7x
topology: tpu7x:2x2x1
jax: 0.10.0
libtpu: 0.0.40
codegen_flags: <defaults>
</compile_context>

<pallas_src>
import functools

import jax
import jax.numpy as jnp
from jax.experimental import pallas as pl
from jax.experimental.pallas import tpu as pltpu

LN_EPS = 1e-5
_VMEM_LIMIT_BYTES = 48 << 20        # explicit; fits v7x (64 MiB/TC), raises v5e's 16 MiB default
_WORKING_SET_BUDGET = 40 << 20      # double-buffered blocks + f32 temporaries


def _cnn_layernorm_kernel(x_ref, w_ref, b_ref, out_ref, *, inv_c: float):
    # x_ref block: (1, C, th, L). Normalize over the channel axis (axis 0 of
    # the squeezed view) — identical to transpose(1,3)->LayerNorm(C)->transpose
    # in the PyTorch module, with zero data relayout.
    x = x_ref[0].astype(jnp.float32)                     # (C, th, L)

    mu = jnp.sum(x, axis=0, keepdims=True) * inv_c       # (1, th, L)
    xc = x - mu
    var = jnp.sum(xc * xc, axis=0, keepdims=True) * inv_c
    inv_std = jax.lax.rsqrt(var + LN_EPS)                # EUP slot, ~free

    # w_ref / b_ref are already (C, 1, L) f32 — plain broadcast, no reshape.
    out_ref[0] = (xc * inv_std * w_ref[...] + b_ref[...]).astype(out_ref.dtype)


def _pick_row_tile(R, C, L, batch, align, max_elems):
    """Largest divisor of R that is align-multiple (or == R), fits the element
    budget, and (when possible) leaves >= 2 total grid steps for the 2 v7x TCs."""
    def candidates():
        for d in range(R, 0, -1):
            if R % d == 0 and (d == R or d % align == 0):
                yield d

    fitting = [d for d in candidates() if C * d * L <= max_elems]
    if not fitting:
        # Over budget even at the minimal aligned tile (huge C*L). Accept it;
        # a ragged last tile is safe here because the reduction is over C, so
        # garbage rows in a partial tile never contaminate valid outputs.
        return min(R, align)
    for d in fitting:                       # descending order
        if batch * (-(-R // d)) >= 2:
            return d
    return fitting[0]


def cnn_layer_norm(x, weight, bias):
    """x: (B, C, H, W); weight, bias: (C,). Returns (B, C, H, W)."""
    B, C, H, W = x.shape
    dtype = x.dtype
    itemsize = jnp.dtype(dtype).itemsize
    align = max(8, 32 // itemsize)                       # dtype-aware sublane alignment

    # Working-set-aware element budget per block:
    #   4 * block (double-buffered in + out, input dtype) + ~3 f32 temporaries.
    per_elem_bytes = 4 * itemsize + 3 * 4
    max_elems = max(1, _WORKING_SET_BUDGET // per_elem_bytes)

    # Lane-dense relayout: largest L | H*W with L % 128 == 0 such that even the
    # minimal (align-row) tile fits the budget.  Fall back to W as lane axis.
    HW = H * W
    L = None
    cand = 128
    while cand <= min(HW, 2048):
        if HW % cand == 0 and C * align * cand <= max_elems:
            L = cand
        cand += 128
    if L is None:
        R, L = H, W
    else:
        R = HW // L
    xr = x.reshape(B, C, R, L)                           # free: trailing dims of a dense array

    th = _pick_row_tile(R, C, L, B, align, max_elems)
    n_r = -(-R // th)

    # Per-channel affine, pre-shaped lane-dense in f32; full-array BlockSpec below.
    w3 = jnp.broadcast_to(weight.astype(jnp.float32).reshape(C, 1, 1), (C, 1, L))
    b3 = jnp.broadcast_to(bias.astype(jnp.float32).reshape(C, 1, 1), (C, 1, L))

    kernel = functools.partial(_cnn_layernorm_kernel, inv_c=1.0 / C)

    out = pl.pallas_call(
        kernel,
        out_shape=jax.ShapeDtypeStruct((B, C, R, L), dtype),
        grid=(B, n_r),
        in_specs=[
            pl.BlockSpec((1, C, th, L), lambda b, i: (b, 0, i, 0)),
            pl.BlockSpec((C, 1, L), lambda b, i: (0, 0, 0)),
            pl.BlockSpec((C, 1, L), lambda b, i: (0, 0, 0)),
        ],
        out_specs=pl.BlockSpec((1, C, th, L), lambda b, i: (b, 0, i, 0)),
        compiler_params=pltpu.CompilerParams(
            dimension_semantics=("parallel", "parallel"),
            vmem_limit_bytes=_VMEM_LIMIT_BYTES,
        ),
    )(xr, w3, b3)
    return out.reshape(B, C, H, W)


# ---------------------------------------------------------------------------
# Pure-JAX reference mirroring the PyTorch forward, for correctness checking.
# ---------------------------------------------------------------------------
def _reference(x, weight, bias):
    xt = jnp.swapaxes(x, 1, 3)                           # (B, W, H, C)
    mu = jnp.mean(xt, axis=-1, keepdims=True)
    var = jnp.mean((xt - mu) ** 2, axis=-1, keepdims=True)
    y = (xt - mu) / jnp.sqrt(var + LN_EPS) * weight + bias
    return jnp.swapaxes(y, 1, 3)                         # (B, C, H, W)


if __name__ == "__main__":
    B, C, H, W = 2, 4, 16, 16  # d_model = C = 4

    key = jax.random.PRNGKey(0)
    kx, kw, kb = jax.random.split(key, 3)
    x = jax.random.normal(kx, (B, C, H, W), dtype=jnp.float32)
    weight = 1.0 + 0.1 * jax.random.normal(kw, (C,), dtype=jnp.float32)
    bias = 0.1 * jax.random.normal(kb, (C,), dtype=jnp.float32)

    out = cnn_layer_norm(x, weight, bias)
    out = jax.block_until_ready(out)

    ref = _reference(x, weight, bias)
    assert out.shape == (B, C, H, W)
    assert jnp.allclose(out, ref, rtol=1e-4, atol=1e-4), (
        f"max abs diff = {jnp.max(jnp.abs(out - ref))}"
    )

    print("KERNEL_OK")
</pallas_src>

<mosaic_0001>
module attributes {stable_mosaic.version = 11 : i64} {
  func.func @_cnn_layernorm_kernel(%arg0: i32, %arg1: i32, %arg2: memref<1x4x1x256xf32, #tpu.memory_space<vmem>>, %arg3: memref<4x1x256xf32, #tpu.memory_space<vmem>>, %arg4: memref<4x1x256xf32, #tpu.memory_space<vmem>>, %arg5: memref<1x4x1x256xf32, #tpu.memory_space<vmem>>) attributes {dimension_semantics = [#tpu.dimension_semantics<parallel>, #tpu.dimension_semantics<parallel>], iteration_bounds = array<i64: 2, 1>, scalar_prefetch = 0 : i64, scratch_operands = 0 : i64, tpu.core_type = #tpu.core_type<tc>, window_params = [{transform_indices = @transform_0, window_bounds = array<i64: 1, 4, 1, 256>}, {pipeline_mode = #tpu.pipeline_mode<synchronous>, transform_indices = @transform_1, window_bounds = array<i64: 4, 1, 256>}, {pipeline_mode = #tpu.pipeline_mode<synchronous>, transform_indices = @transform_2, window_bounds = array<i64: 4, 1, 256>}, {transform_indices = @transform_3, window_bounds = array<i64: 1, 4, 1, 256>}]} {
    %c0 = arith.constant 0 : index
    %c0_0 = arith.constant 0 : index
    %c0_1 = arith.constant 0 : index
    %c0_2 = arith.constant 0 : index
    %0 = vector.load %arg2[%c0, %c0_0, %c0_1, %c0_2] : memref<1x4x1x256xf32, #tpu.memory_space<vmem>>, vector<1x4x1x256xf32>
    %1 = vector.shape_cast %0 : vector<1x4x1x256xf32> to vector<4x1x256xf32>
    %cst = arith.constant dense<0.000000e+00> : vector<1x256xf32>
    %2 = vector.multi_reduction <add>, %1, %cst [0] : vector<4x1x256xf32> to vector<1x256xf32>
    %3 = vector.shape_cast %2 : vector<1x256xf32> to vector<1x1x256xf32>
    %cst_3 = arith.constant 2.500000e-01 : f32
    %4 = vector.broadcast %cst_3 : f32 to vector<1x1x256xf32>
    %5 = arith.mulf %3, %4 : vector<1x1x256xf32>
    %6 = vector.broadcast %5 : vector<1x1x256xf32> to vector<4x1x256xf32>
    %7 = arith.subf %1, %6 : vector<4x1x256xf32>
    %8 = arith.mulf %7, %7 : vector<4x1x256xf32>
    %cst_4 = arith.constant dense<0.000000e+00> : vector<1x256xf32>
    %9 = vector.multi_reduction <add>, %8, %cst_4 [0] : vector<4x1x256xf32> to vector<1x256xf32>
    %10 = vector.shape_cast %9 : vector<1x256xf32> to vector<1x1x256xf32>
    %cst_5 = arith.constant 2.500000e-01 : f32
    %11 = vector.broadcast %cst_5 : f32 to vector<1x1x256xf32>
    %12 = arith.mulf %10, %11 : vector<1x1x256xf32>
    %cst_6 = arith.constant 9.99999974E-6 : f32
    %13 = vector.broadcast %cst_6 : f32 to vector<1x1x256xf32>
    %14 = arith.addf %12, %13 : vector<1x1x256xf32>
    %15 = math.rsqrt %14 : vector<1x1x256xf32>
    %16 = vector.broadcast %15 : vector<1x1x256xf32> to vector<4x1x256xf32>
    %17 = arith.mulf %7, %16 : vector<4x1x256xf32>
    %c0_7 = arith.constant 0 : index
    %c0_8 = arith.constant 0 : index
    %c0_9 = arith.constant 0 : index
    %18 = vector.load %arg3[%c0_7, %c0_8, %c0_9] : memref<4x1x256xf32, #tpu.memory_space<vmem>>, vector<4x1x256xf32>
    %19 = arith.mulf %17, %18 : vector<4x1x256xf32>
    %c0_10 = arith.constant 0 : index
    %c0_11 = arith.constant 0 : index
    %c0_12 = arith.constant 0 : index
    %20 = vector.load %arg4[%c0_10, %c0_11, %c0_12] : memref<4x1x256xf32, #tpu.memory_space<vmem>>, vector<4x1x256xf32>
    %21 = arith.addf %19, %20 : vector<4x1x256xf32>
    %c0_13 = arith.constant 0 : index
    %c0_14 = arith.constant 0 : index
    %c0_15 = arith.constant 0 : index
    %c0_16 = arith.constant 0 : index
    %22 = vector.load %arg5[%c0_13, %c0_14, %c0_15, %c0_16] : memref<1x4x1x256xf32, #tpu.memory_space<vmem>>, vector<1x4x1x256xf32>
    %23 = vector.shape_cast %22 : vector<1x4x1x256xf32> to vector<4x1x256xf32>
    %24 = vector.shape_cast %21 : vector<4x1x256xf32> to vector<1x4x1x256xf32>
    tpu.vector_store %arg5[%c0_13, %c0_14, %c0_15, %c0_16], %24 {strides = array<i32>} : memref<1x4x1x256xf32, #tpu.memory_space<vmem>>, vector<1x4x1x256xf32>,
    return
  }
  func.func @transform_0(%arg0: i32, %arg1: i32) -> (i32, i32, i32, i32) {
    %c0_i32 = arith.constant 0 : i32
    %c0_i32_0 = arith.constant 0 : i32
    %c0_i32_1 = arith.constant 0 : i32
    return %arg0, %c0_i32, %arg1, %c0_i32_0 : i32, i32, i32, i32
  }
  func.func @transform_1(%arg0: i32, %arg1: i32) -> (i32, i32, i32) {
    %c0_i32 = arith.constant 0 : i32
    %c0_i32_0 = arith.constant 0 : i32
    %c0_i32_1 = arith.constant 0 : i32
    %c0_i32_2 = arith.constant 0 : i32
    return %c0_i32, %c0_i32_0, %c0_i32_1 : i32, i32, i32
  }
  func.func @transform_2(%arg0: i32, %arg1: i32) -> (i32, i32, i32) {
    %c0_i32 = arith.constant 0 : i32
    %c0_i32_0 = arith.constant 0 : i32
    %c0_i32_1 = arith.constant 0 : i32
    %c0_i32_2 = arith.constant 0 : i32
    return %c0_i32, %c0_i32_0, %c0_i32_1 : i32, i32, i32
  }
  func.func @transform_3(%arg0: i32, %arg1: i32) -> (i32, i32, i32, i32) {
    %c0_i32 = arith.constant 0 : i32
    %c0_i32_0 = arith.constant 0 : i32
    %c0_i32_1 = arith.constant 0 : i32
    return %arg0, %c0_i32, %arg1, %c0_i32_0 : i32, i32, i32, i32
  }
}

</mosaic_0001>

<llo_original>
// kernel: tpu_custom_call.1
$region0: #{tpu_custom_call.1}
  #allocation0 [shape = 'u32[]', space=smem, size = 0x4, offset = 0x4, fixed_abs, tag = 'smem constant byte address 0x4 - core index']
  #allocation1 [shape = 'u32[144,128]{1,0:T(1,128)}', space=vmem, size = 0x12000, scoped, tag = 'internal scratch']
  %s0 = inlined_call_operand.hbm [shape: f32[2,4,1,256], index: 0, kind: input, shape index: {}]
  %s1 = inlined_call_operand.hbm [shape: f32[4,1,256], index: 1, kind: input, shape index: {}]
  %s2 = inlined_call_operand.hbm [shape: f32[4,1,256], index: 2, kind: input, shape index: {}]
  %s3 = inlined_call_operand.hbm [shape: f32[2,4,1,256], index: 3, kind: output, shape index: {}]
  %s4 = sld [smem:[#allocation0]]
  $region57: #{tpu_custom_call.1} parent=0
    _
  %s6 = ssub.s32 1, %s4
  %s7 = scalar_select 0, %s6, %s4
  $region1: #{tpu_custom_call.1} parent=0
    #allocation2 [shape = 'u8[8192]{0}', space=vmem, size = 0x2000, scoped, tag = 'input window, operand 0']
    #allocation3 [shape = 's32[2]{0}', space=sflag, size = 0x8, scoped, tag = 'scoped memory for tpu_custom_call.1']
    #allocation4 [shape = 's32[2]{0}', space=sflag, size = 0x8, scoped, tag = 'scoped memory for tpu_custom_call.1']
    #allocation5 [shape = 'u8[4096]{0}', space=vmem, size = 0x1000, scoped, tag = 'input window, operand 1, single buffered']
    #allocation6 [shape = 's32[1]{0}', space=sflag, size = 0x4, scoped, tag = 'scoped memory for tpu_custom_call.1']
    #allocation7 [shape = 'u8[4096]{0}', space=vmem, size = 0x1000, scoped, tag = 'input window, operand 2, single buffered']
    #allocation8 [shape = 'u8[8192]{0}', space=vmem, size = 0x2000, scoped, tag = 'output window, operand 0']
    %8 = vsyncpa [#allocation3], 0
    %s9 = scalar_lea.sflag [#allocation3], 1
    %10 = vsyncpa %s9, 0
    %11 = vsyncpa [#allocation6], 0
    %12 = vsyncpa [#allocation4], 0
    %s13 = scalar_lea.sflag [#allocation4], 1
    %14 = vsyncpa %s13, 0
    loop: start=0, step=1, limit=4
    $region2: #{tpu_custom_call.1} parent=1 // loop_pre_header
      _
    $region3: #{tpu_custom_call.1} parent=1 // loop_header
      %s16 = sphi 0, %s20
      %p17 = scmp.ge.s32.totalorder %s16, 4
      %s23 = sphi 0, %s35
      %s24 = sphi 0, %s31
      %s25 = sphi 0, %s23
      %s26 = sphi 0, %s24
      %s27 = sphi 0, %s25
      %s28 = sphi 0, %s26
      %s40 = sphi 0, %s42
      %s43 = sphi 0, %s40
      %s44 = sphi 0, %s43
      %s60 = sphi 0, %s44
      %s64 = sphi 0, %s64
      %s66 = sphi 0, %s64
      %s67 = sphi 0, %s66
      %s81 = sphi 0, %s67
      %s85 = sphi 0, %s85
      %s87 = sphi 0, %s85
      %s88 = sphi 0, %s87
      %s102 = sphi 0, %s88
      %s110 = sphi 0, %s112
      %s113 = sphi 0, %s110
      %s114 = sphi 0, %s113
      %s130 = sphi 0, %s114
    $region4: #{tpu_custom_call.1} parent=1 // loop_header_branch
      %19 = sbr.rel (%p17) target = $region8
    $region5: #{tpu_custom_call.1} parent=1 // loop_body
      %s21 = ssub.s32 %s16, 1
      %s22 = ssub.s32 %s16, 2
      %s29 = sadd.s32 1, %s24
      %p30 = scmp.ge.s32.totalorder %s29, 1
      %s31 = scalar_select %p30, 0, %s29
      %s32 = sadd.s32 1, %s23
      %s33 = scalar_select %p30, %s32, %s23
      %p34 = scmp.ge.s32.totalorder %s33, 2
      %s35 = scalar_select %p34, 0, %s33
      %s36 = ssub.s32 %s23, %s35
      %s37 = ssub.s32 %s24, %s31
      %s38 = sor.u32 %s36, %s37
      %p39 = scmp.eq.s32.totalorder %s38, 0
      %s41 = sadd.s32 %s40, 1
      %s42 = scalar_select %p39, %s40, %s41
      %p45 = pneg %p39
      %p46 = scmp.eq.s32.totalorder %s16, 1
      %p47 = por %p45, %p46
      %p48 = scmp.ne.s32.totalorder %s40, %s43
      %p49 = scmp.eq.s32.totalorder %s16, 0
      %p50 = por %p48, %p49
      %p51 = scmp.ne.s32.totalorder %s40, %s43
      %p52 = scmp.eq.s32.totalorder %s21, 1
      %p53 = por %p51, %p52
      %p54 = scmp.ne.s32.totalorder %s43, %s44
      %p55 = scmp.eq.s32.totalorder %s21, 0
      %p56 = por %p54, %p55
      %p57 = scmp.ne.s32.totalorder %s43, %s44
      %p58 = scmp.eq.s32.totalorder %s22, 1
      %p59 = por %p57, %p58
      %p61 = scmp.ne.s32.totalorder %s44, %s60
      %p62 = scmp.eq.s32.totalorder %s22, 0
      %p63 = por %p61, %p62
      %s65 = sadd.s32 %s64, 1
      %p68 = scmp.eq.s32.totalorder %s16, 1
      %p69 = scmp.ne.s32.totalorder %s64, %s66
      %p70 = scmp.eq.s32.totalorder %s16, 0
      %p71 = por %p69, %p70
      %p72 = scmp.ne.s32.totalorder %s64, %s66
      %p73 = scmp.eq.s32.totalorder %s21, 1
      %p74 = por %p72, %p73
      %p75 = scmp.ne.s32.totalorder %s66, %s67
      %p76 = scmp.eq.s32.totalorder %s21, 0
      %p77 = por %p75, %p76
      %p78 = scmp.ne.s32.totalorder %s66, %s67
      %p79 = scmp.eq.s32.totalorder %s22, 1
      %p80 = por %p78, %p79
      %p82 = scmp.ne.s32.totalorder %s67, %s81
      %p83 = scmp.eq.s32.totalorder %s22, 0
      %p84 = por %p82, %p83
      %s86 = sadd.s32 %s85, 1
      %p89 = scmp.eq.s32.totalorder %s16, 1
      %p90 = scmp.ne.s32.totalorder %s85, %s87
      %p91 = scmp.eq.s32.totalorder %s16, 0
      %p92 = por %p90, %p91
      %p93 = scmp.ne.s32.totalorder %s85, %s87
      %p94 = scmp.eq.s32.totalorder %s21, 1
      %p95 = por %p93, %p94
      %p96 = scmp.ne.s32.totalorder %s87, %s88
      %p97 = scmp.eq.s32.totalorder %s21, 0
      %p98 = por %p96, %p97
      %p99 = scmp.ne.s32.totalorder %s87, %s88
      %p100 = scmp.eq.s32.totalorder %s22, 1
      %p101 = por %p99, %p100
      %p103 = scmp.ne.s32.totalorder %s88, %s102
      %p104 = scmp.eq.s32.totalorder %s22, 0
      %p105 = por %p103, %p104
      %s106 = ssub.s32 %s23, %s35
      %s107 = ssub.s32 %s24, %s31
      %s108 = sor.u32 %s106, %s107
      %p109 = scmp.eq.s32.totalorder %s108, 0
      %s111 = sadd.s32 %s110, 1
      %s112 = scalar_select %p109, %s110, %s111
      %p115 = pneg %p109
      %p116 = scmp.eq.s32.totalorder %s16, 1
      %p117 = por %p115, %p116
      %p118 = scmp.ne.s32.totalorder %s110, %s113
      %p119 = scmp.eq.s32.totalorder %s16, 0
      %p120 = por %p118, %p119
      %p121 = scmp.ne.s32.totalorder %s110, %s113
      %p122 = scmp.eq.s32.totalorder %s21, 1
      %p123 = por %p121, %p122
      %p124 = scmp.ne.s32.totalorder %s113, %s114
      %p125 = scmp.eq.s32.totalorder %s21, 0
      %p126 = por %p124, %p125
      %p127 = scmp.ne.s32.totalorder %s113, %s114
      %p128 = scmp.eq.s32.totalorder %s22, 1
      %p129 = por %p127, %p128
      %p131 = scmp.ne.s32.totalorder %s114, %s130
      %p132 = scmp.eq.s32.totalorder %s22, 0
      %p133 = por %p131, %p132
      %p134 = scmp.le.s32.totalorder 1, %s16
      %p135 = scmp.lt.s32.totalorder %s16, 3
      %p136 = pnand %p134, %p135
      %p137 = pneg %p136
      // Predicated region
      $region9: #{tpu_custom_call.1} parent=5 // pred_check
        _
      $region10: #{tpu_custom_call.1} parent=5 // pred_check_branch
        %139 = sbr.rel (%p136) target = $region12
      $region11: #{tpu_custom_call.1} parent=5 // pred_region
        %s140 = ssub.s32 %s16, 1
        // Predicated region
        $region13: #{tpu_custom_call.1} parent=11 // pred_check
          %p141 = pneg %p77
        $region14: #{tpu_custom_call.1} parent=11 // pred_check_branch
          %143 = sbr.rel (%p141) target = $region16
        $region15: #{tpu_custom_call.1} parent=11 // pred_region
          %s145 = ssub.s32 128, 128
          %146 = vsyncadd [#allocation6], %s145
          %s147 = sshll.u32 [#allocation5], 4
          %s148 = int_to_ptr.vmem [resolvable:$true] %s147
          %153 = dma.hbm_to_vmem [thread:$0]  %s1, 128, %s148, [#allocation6], 32, 32, 2
        $region16: #{tpu_custom_call.1} parent=11 // pred_fallthru
          _
        // Predicated region
        $region17: #{tpu_custom_call.1} parent=11 // pred_check
          %p154 = pneg %p98
        $region18: #{tpu_custom_call.1} parent=11 // pred_check_branch
          %156 = sbr.rel (%p154) target = $region20
        $region19: #{tpu_custom_call.1} parent=11 // pred_region
          %s158 = ssub.s32 128, 128
          %159 = vsyncadd [#allocation6], %s158
          %s160 = sshll.u32 [#allocation7], 4
          %s161 = int_to_ptr.vmem [resolvable:$true] %s160
          %166 = dma.hbm_to_vmem [thread:$0]  %s2, 128, %s161, [#allocation6], 32, 32, 2
        $region20: #{tpu_custom_call.1} parent=11 // pred_fallthru
          _
      $region12: #{tpu_custom_call.1} parent=5 // pred_fallthru
        _
      %p167 = scmp.lt.s32.totalorder %s16, 2
      // Predicated region
      $region21: #{tpu_custom_call.1} parent=5 // pred_check
        %p168 = pneg %p167
      $region22: #{tpu_custom_call.1} parent=5 // pred_check_branch
        %170 = sbr.rel (%p168) target = $region24
      $region23: #{tpu_custom_call.1} parent=5 // pred_region
        // Predicated region
        $region25: #{tpu_custom_call.1} parent=23 // pred_check
          %p171 = pneg %p50
        $region26: #{tpu_custom_call.1} parent=23 // pred_check_branch
          %173 = sbr.rel (%p171) target = $region28
        $region27: #{tpu_custom_call.1} parent=23 // pred_region
          %s174 = sand.u32 %s40, 1
          %s175 = scalar_lea.sflag [#allocation3], %s174
          %s176 = sand.u32 %s40, 1
          %s177 = smul.addr %s176, 8
          %s178 = scalar_lea.vmem [#allocation2], %s177
          %s180 = ssub.s32 128, 128
          %181 = vsyncadd %s175, %s180
          %s182 = smul.addr %s24, 2
          %s183 = smul.addr %s23, 8
          %s184 = sadd.s32 %s182, %s183
          %s185 = smul.addr %s184, 16
          %s186 = scalar_lea.hbm %s0, %s185
          %s187 = sshll.u32 %s178, 4
          %s188 = int_to_ptr.vmem [resolvable:$true] %s187
          %193 = dma.hbm_to_vmem [thread:$0]  %s186, 128, %s188, %s175, 32, 32, 2
        $region28: #{tpu_custom_call.1} parent=23 // pred_fallthru
          _
      $region24: #{tpu_custom_call.1} parent=5 // pred_fallthru
        _
      %p194 = scmp.le.s32.totalorder 1, %s16
      %p195 = scmp.lt.s32.totalorder %s16, 3
      %p196 = pnand %p194, %p195
      %p197 = pneg %p196
      // Predicated region
      $region29: #{tpu_custom_call.1} parent=5 // pred_check
        _
      $region30: #{tpu_custom_call.1} parent=5 // pred_check_branch
        %199 = sbr.rel (%p196) target = $region32
      $region31: #{tpu_custom_call.1} parent=5 // pred_region
        %s200 = ssub.s32 %s16, 1
        %s201 = sand.u32 %s43, 1
        %s202 = scalar_lea.sflag [#allocation3], %s201
        %s203 = sand.u32 %s43, 1
        %s204 = smul.addr %s203, 8
        %s205 = scalar_lea.vmem [#allocation2], %s204
        // Predicated region
        $region33: #{tpu_custom_call.1} parent=31 // pred_check
          %p206 = pneg %p56
        $region34: #{tpu_custom_call.1} parent=31 // pred_check_branch
          %208 = sbr.rel (%p206) target = $region36
        $region35: #{tpu_custom_call.1} parent=31 // pred_region
          %209 = dma.done %s202, 128
        $region36: #{tpu_custom_call.1} parent=31 // pred_fallthru
          _
        // Predicated region
        $region37: #{tpu_custom_call.1} parent=31 // pred_check
          %p210 = pneg %p77
        $region38: #{tpu_custom_call.1} parent=31 // pred_check_branch
          %212 = sbr.rel (%p210) target = $region40
        $region39: #{tpu_custom_call.1} parent=31 // pred_region
          %213 = dma.done [#allocation6], 128
        $region40: #{tpu_custom_call.1} parent=31 // pred_fallthru
          _
        // Predicated region
        $region41: #{tpu_custom_call.1} parent=31 // pred_check
          %p214 = pneg %p98
        $region42: #{tpu_custom_call.1} parent=31 // pred_check_branch
          %216 = sbr.rel (%p214) target = $region44
        $region43: #{tpu_custom_call.1} parent=31 // pred_region
          %217 = dma.done [#allocation6], 128
        $region44: #{tpu_custom_call.1} parent=31 // pred_fallthru
          _
        %s218 = sand.u32 %s43, 1
        %s219 = scalar_lea.sflag [#allocation3], %s218
        %s220 = sand.u32 %s43, 1
        %s221 = smul.addr %s220, 8
        %s222 = scalar_lea.vmem [#allocation2], %s221
        %p223 = pneg %p56
        %p224 = pneg %p53
        %p225 = pneg %p77
        %p226 = pneg %p74
        %p227 = pneg %p98
        %p228 = pneg %p95
        %p229 = pneg %p126
        %p230 = pneg %p123
        %s231 = sand.u32 %s113, 1
        %s232 = scalar_lea.sflag [#allocation4], %s231
        %s233 = sand.u32 %s113, 1
        %s234 = smul.addr %s233, 8
        %s235 = scalar_lea.vmem [#allocation8], %s234
        %v236 = vld [vmem:[%s205] sm:$0x3]
        %v237 = vld [vmem:[%s205 + $0x2] sm:$0x3]
        %v238 = vld [vmem:[%s205 + $0x4] sm:$0x3]
        %v239 = vld [vmem:[%s205 + $0x6] sm:$0x3]
        %v244 = vlaneseq
        %v245 = vshrl.u32 %v244, 7
        %v246 = vsub.s32 0, %v245
        %v247 = vrot.slane %v236, %v246
        %v248 = vlaneseq
        %v249 = vshrl.u32 %v248, 7
        %v250 = vsub.s32 1, %v249
        %v251 = vrot.slane %v236, %v250
        %v252 = vlaneseq
        %v253 = vshrl.u32 %v252, 7
        %v254 = vsub.s32 0, %v253
        %v255 = vrot.slane %v237, %v254
        %v256 = vlaneseq
        %v257 = vshrl.u32 %v256, 7
        %v258 = vsub.s32 1, %v257
        %v259 = vrot.slane %v237, %v258
        %v260 = vlaneseq
        %v261 = vshrl.u32 %v260, 7
        %v262 = vsub.s32 0, %v261
        %v263 = vrot.slane %v238, %v262
        %v264 = vlaneseq
        %v265 = vshrl.u32 %v264, 7
        %v266 = vsub.s32 1, %v265
        %v267 = vrot.slane %v238, %v266
        %v268 = vlaneseq
        %v269 = vshrl.u32 %v268, 7
        %v270 = vsub.s32 0, %v269
        %v271 = vrot.slane %v239, %v270
        %v272 = vlaneseq
        %v273 = vshrl.u32 %v272, 7
        %v274 = vsub.s32 1, %v273
        %v275 = vrot.slane %v239, %v274
        %vm284 = vcmask 1040384
        %v285 = vsel %vm284, %v247, 0.0
        %v286 = vsel %vm284, %v255, 0.0
        %v287 = vadd.f32 %v285, %v286
        %v288 = vsel %vm284, %v263, 0.0
        %v289 = vadd.f32 %v287, %v288
        %v290 = vsel %vm284, %v271, 0.0
        %v291 = vadd.f32 %v289, %v290
        %v292 = vsel %vm284, %v251, 0.0
        %v293 = vsel %vm284, %v259, 0.0
        %v294 = vadd.f32 %v292, %v293
        %v295 = vsel %vm284, %v267, 0.0
        %v296 = vadd.f32 %v294, %v295
        %v297 = vsel %vm284, %v275, 0.0
        %v298 = vadd.f32 %v296, %v297
        %v299 = vmul.f32 %v291, 0.25
        %v300 = vmul.f32 %v298, 0.25
        %v303 = vcombine.low %v299, %v300
        %v305 = vunpack.c.l.s4 1966171168
        %v306 = vunpack.c.0.s8 %v305
        %v307 = vlaneseq
        %v308 = vshrl.u32 %v307, 7
        %v309 = vsub.s32 %v306, %v308
        %v310 = vrot.slane %v303, %v309
        %v312 = vunpack.c.l.s4 1966171168
        %v313 = vunpack.c.0.s8 %v312
        %v314 = vlaneseq
        %v315 = vshrl.u32 %v314, 7
        %v316 = vsub.s32 %v313, %v315
        %v317 = vrot.slane %v310, %v316
        %v319 = vsub.f32 %v236, %v317
        %v320 = vsub.f32 %v237, %v317
        %v321 = vsub.f32 %v238, %v317
        %v322 = vsub.f32 %v239, %v317
        %v323 = vmul.f32 %v319, %v319
        %v324 = vmul.f32 %v320, %v320
        %v325 = vmul.f32 %v321, %v321
        %v326 = vmul.f32 %v322, %v322
        %v331 = vlaneseq
        %v332 = vshrl.u32 %v331, 7
        %v333 = vsub.s32 0, %v332
        %v334 = vrot.slane %v323, %v333
        %v335 = vlaneseq
        %v336 = vshrl.u32 %v335, 7
        %v337 = vsub.s32 1, %v336
        %v338 = vrot.slane %v323, %v337
        %v339 = vlaneseq
        %v340 = vshrl.u32 %v339, 7
        %v341 = vsub.s32 0, %v340
        %v342 = vrot.slane %v324, %v341
        %v343 = vlaneseq
        %v344 = vshrl.u32 %v343, 7
        %v345 = vsub.s32 1, %v344
        %v346 = vrot.slane %v324, %v345
        %v347 = vlaneseq
        %v348 = vshrl.u32 %v347, 7
        %v349 = vsub.s32 0, %v348
        %v350 = vrot.slane %v325, %v349
        %v351 = vlaneseq
        %v352 = vshrl.u32 %v351, 7
        %v353 = vsub.s32 1, %v352
        %v354 = vrot.slane %v325, %v353
        %v355 = vlaneseq
        %v356 = vshrl.u32 %v355, 7
        %v357 = vsub.s32 0, %v356
        %v358 = vrot.slane %v326, %v357
        %v359 = vlaneseq
        %v360 = vshrl.u32 %v359, 7
        %v361 = vsub.s32 1, %v360
        %v362 = vrot.slane %v326, %v361
        %v371 = vsel %vm284, %v334, 0.0
        %v372 = vsel %vm284, %v342, 0.0
        %v373 = vadd.f32 %v371, %v372
        %v374 = vsel %vm284, %v350, 0.0
        %v375 = vadd.f32 %v373, %v374
        %v376 = vsel %vm284, %v358, 0.0
        %v377 = vadd.f32 %v375, %v376
        %v378 = vsel %vm284, %v338, 0.0
        %v379 = vsel %vm284, %v346, 0.0
        %v380 = vadd.f32 %v378, %v379
        %v381 = vsel %vm284, %v354, 0.0
        %v382 = vadd.f32 %v380, %v381
        %v383 = vsel %vm284, %v362, 0.0
        %v384 = vadd.f32 %v382, %v383
        %v385 = vmul.f32 %v377, 0.25
        %v386 = vmul.f32 %v384, 0.25
        %v387 = vadd.f32 %v385, 1e-05
        %v388 = vadd.f32 %v386, 1e-05
        %v389 = vrsqrt.pop %v387
        %v390 = vrsqrt.pop %v388
        %v393 = vcombine.low %v389, %v390
        %v395 = vunpack.c.l.s4 1966171168
        %v396 = vunpack.c.0.s8 %v395
        %v397 = vlaneseq
        %v398 = vshrl.u32 %v397, 7
        %v399 = vsub.s32 %v396, %v398
        %v400 = vrot.slane %v393, %v399
        %v402 = vunpack.c.l.s4 1966171168
        %v403 = vunpack.c.0.s8 %v402
        %v404 = vlaneseq
        %v405 = vshrl.u32 %v404, 7
        %v406 = vsub.s32 %v403, %v405
        %v407 = vrot.slane %v400, %v406
        %v409 = vmul.f32 %v319, %v407
        %v410 = vmul.f32 %v320, %v407
        %v411 = vmul.f32 %v321, %v407
        %v412 = vmul.f32 %v322, %v407
        %v413 = vld [vmem:[#allocation5] sm:$0x3]
        %v414 = vld [vmem:[#allocation5 + $0x2] sm:$0x3]
        %v415 = vld [vmem:[#allocation5 + $0x4] sm:$0x3]
        %v416 = vld [vmem:[#allocation5 + $0x6] sm:$0x3]
        %v417 = vmul.f32 %v409, %v413
        %v418 = vmul.f32 %v410, %v414
        %v419 = vmul.f32 %v411, %v415
        %v420 = vmul.f32 %v412, %v416
        %v421 = vld [vmem:[#allocation7] sm:$0x3]
        %v422 = vld [vmem:[#allocation7 + $0x2] sm:$0x3]
        %v423 = vld [vmem:[#allocation7 + $0x4] sm:$0x3]
        %v424 = vld [vmem:[#allocation7 + $0x6] sm:$0x3]
        %v425 = vadd.f32 %v417, %v421
        %v426 = vadd.f32 %v418, %v422
        %v427 = vadd.f32 %v419, %v423
        %v428 = vadd.f32 %v420, %v424
        %v429 = vlaneseq
        %vm430 = vcmp.ge.s32.totalorder %v429, 0
        %vm431 = vcmp.lt.s32.totalorder %v429, 256
        %vm432 = vmand %vm430, %vm431
        %433 = vst.msk [vmem:[%s235] sm:$0x3] %vm432, %v425
        %434 = vst.msk [vmem:[%s235 + $0x2] sm:$0x3] %vm432, %v426
        %435 = vst.msk [vmem:[%s235 + $0x4] sm:$0x3] %vm432, %v427
        %436 = vst.msk [vmem:[%s235 + $0x6] sm:$0x3] %vm432, %v428
        %s437 = sand.u32 %s113, 1
        %s438 = scalar_lea.sflag [#allocation4], %s437
        %s439 = sand.u32 %s113, 1
        %s440 = smul.addr %s439, 8
        %s441 = scalar_lea.vmem [#allocation8], %s440
        // Predicated region
        $region45: #{tpu_custom_call.1} parent=31 // pred_check
          %p442 = pneg %p123
        $region46: #{tpu_custom_call.1} parent=31 // pred_check_branch
          %444 = sbr.rel (%p442) target = $region48
        $region47: #{tpu_custom_call.1} parent=31 // pred_region
          %s446 = ssub.s32 128, 128
          %447 = vsyncadd %s438, %s446
          %s448 = smul.addr %s26, 2
          %s449 = smul.addr %s25, 8
          %s450 = sadd.s32 %s448, %s449
          %s451 = smul.addr %s450, 16
          %s452 = scalar_lea.hbm %s3, %s451
          %s453 = sshll.u32 %s441, 4
          %s454 = int_to_ptr.vmem [resolvable:$true] %s453
          %459 = dma.vmem_to_hbm [thread:$0]  %s454, 128, %s452, %s438, 32, 32, 2
        $region48: #{tpu_custom_call.1} parent=31 // pred_fallthru
          _
      $region32: #{tpu_custom_call.1} parent=5 // pred_fallthru
        _
      %p460 = scmp.le.s32.totalorder 2, %s16
      // Predicated region
      $region49: #{tpu_custom_call.1} parent=5 // pred_check
        %p461 = pneg %p460
      $region50: #{tpu_custom_call.1} parent=5 // pred_check_branch
        %463 = sbr.rel (%p461) target = $region52
      $region51: #{tpu_custom_call.1} parent=5 // pred_region
        %s464 = ssub.s32 %s16, 2
        // Predicated region
        $region53: #{tpu_custom_call.1} parent=51 // pred_check
          %p465 = pneg %p129
        $region54: #{tpu_custom_call.1} parent=51 // pred_check_branch
          %467 = sbr.rel (%p465) target = $region56
        $region55: #{tpu_custom_call.1} parent=51 // pred_region
          %s468 = sand.u32 %s114, 1
          %s469 = scalar_lea.sflag [#allocation4], %s468
          %s470 = sand.u32 %s114, 1
          %s471 = smul.addr %s470, 8
          %s472 = scalar_lea.vmem [#allocation8], %s471
          %473 = dma.done %s469, 128
        $region56: #{tpu_custom_call.1} parent=51 // pred_fallthru
          _
      $region52: #{tpu_custom_call.1} parent=5 // pred_fallthru
        _
    $region6: #{tpu_custom_call.1} parent=1 // loop_footer
      %s20 = sadd.s32 1, %s16
    $region7: #{tpu_custom_call.1} parent=1 // loop_footer_branch
      %15 = sbr.rel target = $region3
    $region8: #{tpu_custom_call.1} parent=1 // loop_exit
      _
    %474 = vsyncpa [#allocation3], 1
    %s475 = scalar_lea.sflag [#allocation3], 1
    %476 = vsyncpa %s475, 1
    %477 = vsyncpa [#allocation6], 1
    %478 = vsyncpa [#allocation4], 1
    %s479 = scalar_lea.sflag [#allocation4], 1
    %480 = vsyncpa %s479, 1

</llo_original>
